<compile_context>
chip_gen: v7x
topology: tpu7x:2x2x1
jax: 0.10.0
libtpu: 0.0.40
codegen_flags: <defaults>
</compile_context>

<pallas_src>
import functools

import jax
import jax.numpy as jnp
from jax.experimental import pallas as pl
from jax.experimental.pallas import tpu as pltpu

# "constant" SRF coefficients from the PyTorch module.
CONSTANT_SRF = (-0.40107638, 0.95721835, 0.21377654, 0.16151386)

_VMEM_LIMIT_BYTES = 32 * 1024 * 1024   # safe on v5e/v6e (128 MiB) and v7x (64 MiB)
_MAX_TILE_ROWS = 2048                  # 5ch * 2048 * 128 * 4B = 5 MiB input block
_MAX_TILE_HW = 128 * 512               # fallback (HW % 128 != 0) lane-tile size


def _rec_kernel(x_ref, rec_ref, *, w0, w1, w2, w3):
    """Weighted sum over HRMS channels (channels 1..4 of the 5-channel block).

    x_ref   : VMEM f32[1, 5, TR, 128]   (or [1, 5, THW] on the fallback path)
    rec_ref : VMEM f32[1, 1, TR, 128]   (or [1, 1, THW])

    Channel slabs are read straight from the Ref so only one channel chunk plus
    the accumulator is live per vreg strip.
    """
    rec_ref[...] = (w0 * x_ref[:, 1:2] + w1 * x_ref[:, 2:3]
                    + w2 * x_ref[:, 3:4] + w3 * x_ref[:, 4:5])


def _sublane_multiple(dtype):
    # (8,128) tiling minimum for f32, (16,128) for bf16, (32,128) for int8/fp8.
    return {4: 8, 2: 16, 1: 32}.get(jnp.dtype(dtype).itemsize, 8)


def _pan_recon(x_net, weights):
    """x_net: f32[N, 5, H, W]; returns weighted HRMS channel sum, f32[N, 1, H, W]."""
    N, C, H, W = x_net.shape
    assert C == 5
    HW = H * W
    dt = x_net.dtype
    mult = _sublane_multiple(dt)
    w0, w1, w2, w3 = (float(w) for w in weights)
    kernel = functools.partial(_rec_kernel, w0=w0, w1=w1, w2=w2, w3=w3)
    cparams = pltpu.CompilerParams(
        dimension_semantics=("parallel", "parallel"),
        vmem_limit_bytes=_VMEM_LIMIT_BYTES)

    if HW % 128 == 0:
        # Lane/sublane-dense layout: spatial axis -> (rows, 128).
        R = HW // 128
        xr = x_net.reshape(N, 5, R, 128)
        if R > _MAX_TILE_ROWS:
            tr = _MAX_TILE_ROWS - (_MAX_TILE_ROWS % mult)   # bounded, dense tile
        else:
            tr = R                                          # full extent: always legal
            if N == 1 and R > mult:
                # Guarantee >=2 parallel grid steps so both v7x TCs get work.
                half = (R + 1) // 2
                tr = ((half + mult - 1) // mult) * mult
        grid = (N, pl.cdiv(R, tr))                          # partial last block masked
        rec = pl.pallas_call(
            kernel,
            grid=grid,
            in_specs=[pl.BlockSpec((1, 5, tr, 128), lambda b, r: (b, 0, r, 0))],
            out_specs=pl.BlockSpec((1, 1, tr, 128), lambda b, r: (b, 0, r, 0)),
            out_shape=jax.ShapeDtypeStruct((N, 1, R, 128), dt),
            compiler_params=cparams,
        )(xr)
        return rec.reshape(N, 1, H, W)

    # Fallback for spatial sizes not divisible by 128: tile the flattened
    # spatial axis (lane dim) with a cdiv grid; blocks stay bounded for any
    # image size (never a whole-image block).
    xr = x_net.reshape(N, 5, HW)
    thw = HW if HW <= _MAX_TILE_HW else _MAX_TILE_HW        # full extent or x128
    grid = (N, pl.cdiv(HW, thw))
    rec = pl.pallas_call(
        kernel,
        grid=grid,
        in_specs=[pl.BlockSpec((1, 5, thw), lambda b, h: (b, 0, h))],
        out_specs=pl.BlockSpec((1, 1, thw), lambda b, h: (b, 0, h)),
        out_shape=jax.ShapeDtypeStruct((N, 1, HW), dt),
        compiler_params=cparams,
    )(xr)
    return rec.reshape(N, 1, H, W)


def pans_from_inputs(y, x_net, srf_from="constant"):
    """JAX/Pallas equivalent of BaseStructuralLoss.pans_from_inputs.

    y, x_net: f32[N, 5, H, W] (NCHW); pan = channel 0, hrms = channels 1:5.
    Returns (pan, pan_recon), each f32[N, 1, H, W].
    """
    assert srf_from in ("estimate", "average", "constant")
    N, C, H, W = y.shape
    assert C == 5 and x_net.shape == y.shape

    # pan_from_volume(y): pure channel slice -> leave to XLA (fusable, no copy
    # through VMEM needed).
    pan = y[:, 0:1]

    if srf_from == "estimate":
        # SRF jointly trained with the model; recon is x_net's pan channel.
        return pan, x_net[:, 0:1]

    weights = (0.25, 0.25, 0.25, 0.25) if srf_from == "average" else CONSTANT_SRF
    rec = _pan_recon(x_net, weights)       # full 5-ch volume; channels sliced in-block
    return pan, rec


# TODO(synk): BaseStructuralLoss.forward raises NotImplementedError in the
# reference module (abstract base class); only pans_from_inputs is implemented.
# TODO(synk): fusing the downstream structural-loss reduction into this kernel
# (emit per-block loss partials instead of writing pan_recon to HBM) would cut
# another ~30-40% of HBM traffic but needs the concrete subclass's loss.


def _reference(y, x_net, srf_from):
    pan = y[:, 0:1]
    hrms = x_net[:, 1:5]
    if srf_from == "average":
        rec = jnp.mean(hrms, axis=1, keepdims=True)
    elif srf_from == "constant":
        w = jnp.asarray(CONSTANT_SRF, jnp.float32).reshape(1, 4, 1, 1)
        rec = jnp.sum(hrms * w, axis=1, keepdims=True)
    else:
        rec = x_net[:, 0:1]
    return pan, rec


def _check(N, H, W, key):
    k1, k2 = jax.random.split(key)
    y = jax.random.normal(k1, (N, 5, H, W), dtype=jnp.float32)
    x_net = jax.random.normal(k2, (N, 5, H, W), dtype=jnp.float32)
    ok = True
    for mode in ("constant", "average", "estimate"):
        pan, rec = pans_from_inputs(y, x_net, srf_from=mode)
        jax.block_until_ready(pan)
        jax.block_until_ready(rec)
        pan_ref, rec_ref = _reference(y, x_net, mode)
        ok &= bool(jnp.allclose(pan, pan_ref, atol=1e-5, rtol=1e-5))
        ok &= bool(jnp.allclose(rec, rec_ref, atol=1e-5, rtol=1e-5))
    return ok


if __name__ == "__main__":
    key = jax.random.PRNGKey(0)
    k1, k2, k3 = jax.random.split(key, 3)

    ok = True
    ok &= _check(2, 16, 16, k1)   # HW % 128 == 0 path (dense (rows,128) layout)
    ok &= _check(2, 12, 12, k2)   # HW % 128 != 0 fallback path
    ok &= _check(1, 64, 64, k3)   # batch-1 path (row split for >=2 parallel steps)

    if ok:
        print("KERNEL_OK")
    else:
        print("KERNEL_MISMATCH")
</pallas_src>

<mosaic_0001>
module attributes {stable_mosaic.version = 11 : i64} {
  func.func @_rec_kernel(%arg0: i32, %arg1: i32, %arg2: memref<1x5x2x128xf32, #tpu.memory_space<vmem>>, %arg3: memref<1x1x2x128xf32, #tpu.memory_space<vmem>>) attributes {dimension_semantics = [#tpu.dimension_semantics<parallel>, #tpu.dimension_semantics<parallel>], iteration_bounds = array<i64: 2, 1>, scalar_prefetch = 0 : i64, scratch_operands = 0 : i64, tpu.core_type = #tpu.core_type<tc>, window_params = [{transform_indices = @transform_0, window_bounds = array<i64: 1, 5, 2, 128>}, {transform_indices = @transform_1, window_bounds = array<i64: 1, 1, 2, 128>}]} {
    %c0 = arith.constant 0 : index
    %c1 = arith.constant 1 : index
    %c0_0 = arith.constant 0 : index
    %c0_1 = arith.constant 0 : index
    %0 = vector.load %arg2[%c0, %c1, %c0_0, %c0_1] : memref<1x5x2x128xf32, #tpu.memory_space<vmem>>, vector<1x1x2x128xf32>
    %cst = arith.constant -0.401076376 : f32
    %1 = vector.broadcast %cst : f32 to vector<1x1x2x128xf32>
    %2 = arith.mulf %1, %0 : vector<1x1x2x128xf32>
    %c0_2 = arith.constant 0 : index
    %c2 = arith.constant 2 : index
    %c0_3 = arith.constant 0 : index
    %c0_4 = arith.constant 0 : index
    %3 = vector.load %arg2[%c0_2, %c2, %c0_3, %c0_4] : memref<1x5x2x128xf32, #tpu.memory_space<vmem>>, vector<1x1x2x128xf32>
    %cst_5 = arith.constant 0.957218348 : f32
    %4 = vector.broadcast %cst_5 : f32 to vector<1x1x2x128xf32>
    %5 = arith.mulf %4, %3 : vector<1x1x2x128xf32>
    %6 = arith.addf %2, %5 : vector<1x1x2x128xf32>
    %c0_6 = arith.constant 0 : index
    %c3 = arith.constant 3 : index
    %c0_7 = arith.constant 0 : index
    %c0_8 = arith.constant 0 : index
    %7 = vector.load %arg2[%c0_6, %c3, %c0_7, %c0_8] : memref<1x5x2x128xf32, #tpu.memory_space<vmem>>, vector<1x1x2x128xf32>
    %cst_9 = arith.constant 0.213776544 : f32
    %8 = vector.broadcast %cst_9 : f32 to vector<1x1x2x128xf32>
    %9 = arith.mulf %8, %7 : vector<1x1x2x128xf32>
    %10 = arith.addf %6, %9 : vector<1x1x2x128xf32>
    %c0_10 = arith.constant 0 : index
    %c4 = arith.constant 4 : index
    %c0_11 = arith.constant 0 : index
    %c0_12 = arith.constant 0 : index
    %11 = vector.load %arg2[%c0_10, %c4, %c0_11, %c0_12] : memref<1x5x2x128xf32, #tpu.memory_space<vmem>>, vector<1x1x2x128xf32>
    %cst_13 = arith.constant 0.161513865 : f32
    %12 = vector.broadcast %cst_13 : f32 to vector<1x1x2x128xf32>
    %13 = arith.mulf %12, %11 : vector<1x1x2x128xf32>
    %14 = arith.addf %10, %13 : vector<1x1x2x128xf32>
    %c0_14 = arith.constant 0 : index
    %c0_15 = arith.constant 0 : index
    %c0_16 = arith.constant 0 : index
    %c0_17 = arith.constant 0 : index
    %15 = vector.load %arg3[%c0_14, %c0_15, %c0_16, %c0_17] : memref<1x1x2x128xf32, #tpu.memory_space<vmem>>, vector<1x1x2x128xf32>
    tpu.vector_store %arg3[%c0_14, %c0_15, %c0_16, %c0_17], %14 {strides = array<i32>} : memref<1x1x2x128xf32, #tpu.memory_space<vmem>>, vector<1x1x2x128xf32>,
    return
  }
  func.func @transform_0(%arg0: i32, %arg1: i32) -> (i32, i32, i32, i32) {
    %c0_i32 = arith.constant 0 : i32
    %c0_i32_0 = arith.constant 0 : i32
    %c0_i32_1 = arith.constant 0 : i32
    return %arg0, %c0_i32, %arg1, %c0_i32_0 : i32, i32, i32, i32
  }
  func.func @transform_1(%arg0: i32, %arg1: i32) -> (i32, i32, i32, i32) {
    %c0_i32 = arith.constant 0 : i32
    %c0_i32_0 = arith.constant 0 : i32
    %c0_i32_1 = arith.constant 0 : i32
    return %arg0, %c0_i32, %arg1, %c0_i32_0 : i32, i32, i32, i32
  }
}

</mosaic_0001>

<llo_original>
// kernel: tpu_custom_call.1
$region0: #{tpu_custom_call.1}
  #allocation0 [shape = 'u32[]', space=smem, size = 0x4, offset = 0x4, fixed_abs, tag = 'smem constant byte address 0x4 - core index']
  #allocation1 [shape = 'u32[144,128]{1,0:T(1,128)}', space=vmem, size = 0x12000, scoped, tag = 'internal scratch']
  %s0 = inlined_call_operand.hbm [shape: f32[2,5,2,128], index: 0, kind: input, shape index: {}]
  %s1 = inlined_call_operand.hbm [shape: f32[2,1,2,128], index: 1, kind: output, shape index: {}]
  %s2 = sld [smem:[#allocation0]]
  $region41: #{tpu_custom_call.1} parent=0
    _
  %s4 = ssub.s32 1, %s2
  %s5 = scalar_select 0, %s4, %s2
  $region1: #{tpu_custom_call.1} parent=0
    #allocation2 [shape = 'u8[10240]{0}', space=vmem, size = 0x2800, scoped, tag = 'input window, operand 0']
    #allocation3 [shape = 's32[2]{0}', space=sflag, size = 0x8, scoped, tag = 'scoped memory for tpu_custom_call.1']
    #allocation4 [shape = 's32[2]{0}', space=sflag, size = 0x8, scoped, tag = 'scoped memory for tpu_custom_call.1']
    #allocation5 [shape = 'u8[2048]{0}', space=vmem, size = 0x800, scoped, tag = 'output window, operand 0']
    %6 = vsyncpa [#allocation3], 0
    %s7 = scalar_lea.sflag [#allocation3], 1
    %8 = vsyncpa %s7, 0
    %9 = vsyncpa [#allocation4], 0
    %s10 = scalar_lea.sflag [#allocation4], 1
    %11 = vsyncpa %s10, 0
    loop: start=0, step=1, limit=4
    $region2: #{tpu_custom_call.1} parent=1 // loop_pre_header
      _
    $region3: #{tpu_custom_call.1} parent=1 // loop_header
      %s13 = sphi 0, %s17
      %p14 = scmp.ge.s32.totalorder %s13, 4
      %s20 = sphi 0, %s32
      %s21 = sphi 0, %s28
      %s22 = sphi 0, %s20
      %s23 = sphi 0, %s21
      %s24 = sphi 0, %s22
      %s25 = sphi 0, %s23
      %s37 = sphi 0, %s39
      %s40 = sphi 0, %s37
      %s41 = sphi 0, %s40
      %s57 = sphi 0, %s41
      %s65 = sphi 0, %s67
      %s68 = sphi 0, %s65
      %s69 = sphi 0, %s68
      %s85 = sphi 0, %s69
    $region4: #{tpu_custom_call.1} parent=1 // loop_header_branch
      %16 = sbr.rel (%p14) target = $region8
    $region5: #{tpu_custom_call.1} parent=1 // loop_body
      %s18 = ssub.s32 %s13, 1
      %s19 = ssub.s32 %s13, 2
      %s26 = sadd.s32 1, %s21
      %p27 = scmp.ge.s32.totalorder %s26, 1
      %s28 = scalar_select %p27, 0, %s26
      %s29 = sadd.s32 1, %s20
      %s30 = scalar_select %p27, %s29, %s20
      %p31 = scmp.ge.s32.totalorder %s30, 2
      %s32 = scalar_select %p31, 0, %s30
      %s33 = ssub.s32 %s20, %s32
      %s34 = ssub.s32 %s21, %s28
      %s35 = sor.u32 %s33, %s34
      %p36 = scmp.eq.s32.totalorder %s35, 0
      %s38 = sadd.s32 %s37, 1
      %s39 = scalar_select %p36, %s37, %s38
      %p42 = pneg %p36
      %p43 = scmp.eq.s32.totalorder %s13, 1
      %p44 = por %p42, %p43
      %p45 = scmp.ne.s32.totalorder %s37, %s40
      %p46 = scmp.eq.s32.totalorder %s13, 0
      %p47 = por %p45, %p46
      %p48 = scmp.ne.s32.totalorder %s37, %s40
      %p49 = scmp.eq.s32.totalorder %s18, 1
      %p50 = por %p48, %p49
      %p51 = scmp.ne.s32.totalorder %s40, %s41
      %p52 = scmp.eq.s32.totalorder %s18, 0
      %p53 = por %p51, %p52
      %p54 = scmp.ne.s32.totalorder %s40, %s41
      %p55 = scmp.eq.s32.totalorder %s19, 1
      %p56 = por %p54, %p55
      %p58 = scmp.ne.s32.totalorder %s41, %s57
      %p59 = scmp.eq.s32.totalorder %s19, 0
      %p60 = por %p58, %p59
      %s61 = ssub.s32 %s20, %s32
      %s62 = ssub.s32 %s21, %s28
      %s63 = sor.u32 %s61, %s62
      %p64 = scmp.eq.s32.totalorder %s63, 0
      %s66 = sadd.s32 %s65, 1
      %s67 = scalar_select %p64, %s65, %s66
      %p70 = pneg %p64
      %p71 = scmp.eq.s32.totalorder %s13, 1
      %p72 = por %p70, %p71
      %p73 = scmp.ne.s32.totalorder %s65, %s68
      %p74 = scmp.eq.s32.totalorder %s13, 0
      %p75 = por %p73, %p74
      %p76 = scmp.ne.s32.totalorder %s65, %s68
      %p77 = scmp.eq.s32.totalorder %s18, 1
      %p78 = por %p76, %p77
      %p79 = scmp.ne.s32.totalorder %s68, %s69
      %p80 = scmp.eq.s32.totalorder %s18, 0
      %p81 = por %p79, %p80
      %p82 = scmp.ne.s32.totalorder %s68, %s69
      %p83 = scmp.eq.s32.totalorder %s19, 1
      %p84 = por %p82, %p83
      %p86 = scmp.ne.s32.totalorder %s69, %s85
      %p87 = scmp.eq.s32.totalorder %s19, 0
      %p88 = por %p86, %p87
      %p89 = scmp.le.s32.totalorder 1, %s13
      %p90 = scmp.lt.s32.totalorder %s13, 3
      %p91 = pnand %p89, %p90
      %p92 = pneg %p91
      // Predicated region
      $region9: #{tpu_custom_call.1} parent=5 // pred_check
        _
      $region10: #{tpu_custom_call.1} parent=5 // pred_check_branch
        %94 = sbr.rel (%p91) target = $region12
      $region11: #{tpu_custom_call.1} parent=5 // pred_region
        %s95 = ssub.s32 %s13, 1
      $region12: #{tpu_custom_call.1} parent=5 // pred_fallthru
        _
      %p96 = scmp.lt.s32.totalorder %s13, 2
      // Predicated region
      $region13: #{tpu_custom_call.1} parent=5 // pred_check
        %p97 = pneg %p96
      $region14: #{tpu_custom_call.1} parent=5 // pred_check_branch
        %99 = sbr.rel (%p97) target = $region16
      $region15: #{tpu_custom_call.1} parent=5 // pred_region
        // Predicated region
        $region17: #{tpu_custom_call.1} parent=15 // pred_check
          %p100 = pneg %p47
        $region18: #{tpu_custom_call.1} parent=15 // pred_check_branch
          %102 = sbr.rel (%p100) target = $region20
        $region19: #{tpu_custom_call.1} parent=15 // pred_region
          %s103 = sand.u32 %s37, 1
          %s104 = scalar_lea.sflag [#allocation3], %s103
          %s105 = sand.u32 %s37, 1
          %s106 = smul.addr %s105, 10
          %s107 = scalar_lea.vmem [#allocation2], %s106
          %s109 = ssub.s32 160, 160
          %110 = vsyncadd %s104, %s109
          %s111 = smul.addr %s20, 5
          %s112 = sadd.s32 %s21, %s111
          %s113 = smul.addr %s112, 32
          %s114 = scalar_lea.hbm %s0, %s113
          %s115 = sshll.u32 %s107, 4
          %s116 = int_to_ptr.vmem [resolvable:$true] %s115
          %121 = dma.hbm_to_vmem [thread:$0]  %s114, 160, %s116, %s104, 32, 32, 2
        $region20: #{tpu_custom_call.1} parent=15 // pred_fallthru
          _
      $region16: #{tpu_custom_call.1} parent=5 // pred_fallthru
        _
      %p122 = scmp.le.s32.totalorder 1, %s13
      %p123 = scmp.lt.s32.totalorder %s13, 3
      %p124 = pnand %p122, %p123
      %p125 = pneg %p124
      // Predicated region
      $region21: #{tpu_custom_call.1} parent=5 // pred_check
        _
      $region22: #{tpu_custom_call.1} parent=5 // pred_check_branch
        %127 = sbr.rel (%p124) target = $region24
      $region23: #{tpu_custom_call.1} parent=5 // pred_region
        %s128 = ssub.s32 %s13, 1
        %s129 = sand.u32 %s40, 1
        %s130 = scalar_lea.sflag [#allocation3], %s129
        %s131 = sand.u32 %s40, 1
        %s132 = smul.addr %s131, 10
        %s133 = scalar_lea.vmem [#allocation2], %s132
        // Predicated region
        $region25: #{tpu_custom_call.1} parent=23 // pred_check
          %p134 = pneg %p53
        $region26: #{tpu_custom_call.1} parent=23 // pred_check_branch
          %136 = sbr.rel (%p134) target = $region28
        $region27: #{tpu_custom_call.1} parent=23 // pred_region
          %137 = dma.done %s130, 160
        $region28: #{tpu_custom_call.1} parent=23 // pred_fallthru
          _
        %s138 = sand.u32 %s40, 1
        %s139 = scalar_lea.sflag [#allocation3], %s138
        %s140 = sand.u32 %s40, 1
        %s141 = smul.addr %s140, 10
        %s142 = scalar_lea.vmem [#allocation2], %s141
        %p143 = pneg %p53
        %p144 = pneg %p50
        %p145 = pneg %p81
        %p146 = pneg %p78
        %s147 = sand.u32 %s68, 1
        %s148 = scalar_lea.sflag [#allocation4], %s147
        %s149 = sand.u32 %s68, 1
        %s150 = smul.addr %s149, 2
        %s151 = scalar_lea.vmem [#allocation5], %s150
        %s152 = scalar_lea.vmem %s133, 2 [#allocation2]
        %v153 = vld [vmem:[%s152] sm:$0x3]
        %v154 = vmul.f32 %v153, -0.40107638
        %s155 = scalar_lea.vmem %s133, 4 [#allocation2]
        %v156 = vld [vmem:[%s155] sm:$0x3]
        %v157 = vmul.f32 %v156, 0.95721835
        %v158 = vadd.f32 %v154, %v157
        %s159 = scalar_lea.vmem %s133, 6 [#allocation2]
        %v160 = vld [vmem:[%s159] sm:$0x3]
        %v161 = vmul.f32 %v160, 0.21377654
        %v162 = vadd.f32 %v158, %v161
        %s163 = scalar_lea.vmem %s133, 8 [#allocation2]
        %v164 = vld [vmem:[%s163] sm:$0x3]
        %v165 = vmul.f32 %v164, 0.16151386
        %v166 = vadd.f32 %v162, %v165
        %167 = vst [vmem:[%s151] sm:$0x3] %v166
        %s168 = sand.u32 %s68, 1
        %s169 = scalar_lea.sflag [#allocation4], %s168
        %s170 = sand.u32 %s68, 1
        %s171 = smul.addr %s170, 2
        %s172 = scalar_lea.vmem [#allocation5], %s171
        // Predicated region
        $region29: #{tpu_custom_call.1} parent=23 // pred_check
          %p173 = pneg %p78
        $region30: #{tpu_custom_call.1} parent=23 // pred_check_branch
          %175 = sbr.rel (%p173) target = $region32
        $region31: #{tpu_custom_call.1} parent=23 // pred_region
          %s177 = ssub.s32 32, 32
          %178 = vsyncadd %s169, %s177
          %s179 = sadd.s32 %s23, %s22
          %s180 = smul.addr %s179, 32
          %s181 = scalar_lea.hbm %s1, %s180
          %s183 = sshll.u32 %s172, 4
          %s184 = int_to_ptr.vmem [resolvable:$true] %s183
          %186 = dma.vmem_to_hbm [thread:$0]  %s184, 32, %s181, %s169
        $region32: #{tpu_custom_call.1} parent=23 // pred_fallthru
          _
      $region24: #{tpu_custom_call.1} parent=5 // pred_fallthru
        _
      %p187 = scmp.le.s32.totalorder 2, %s13
      // Predicated region
      $region33: #{tpu_custom_call.1} parent=5 // pred_check
        %p188 = pneg %p187
      $region34: #{tpu_custom_call.1} parent=5 // pred_check_branch
        %190 = sbr.rel (%p188) target = $region36
      $region35: #{tpu_custom_call.1} parent=5 // pred_region
        %s191 = ssub.s32 %s13, 2
        // Predicated region
        $region37: #{tpu_custom_call.1} parent=35 // pred_check
          %p192 = pneg %p84
        $region38: #{tpu_custom_call.1} parent=35 // pred_check_branch
          %194 = sbr.rel (%p192) target = $region40
        $region39: #{tpu_custom_call.1} parent=35 // pred_region
          %s195 = sand.u32 %s69, 1
          %s196 = scalar_lea.sflag [#allocation4], %s195
          %s197 = sand.u32 %s69, 1
          %s198 = smul.addr %s197, 2
          %s199 = scalar_lea.vmem [#allocation5], %s198
          %200 = dma.done %s196, 32
        $region40: #{tpu_custom_call.1} parent=35 // pred_fallthru
          _
      $region36: #{tpu_custom_call.1} parent=5 // pred_fallthru
        _
    $region6: #{tpu_custom_call.1} parent=1 // loop_footer
      %s17 = sadd.s32 1, %s13
    $region7: #{tpu_custom_call.1} parent=1 // loop_footer_branch
      %12 = sbr.rel target = $region3
    $region8: #{tpu_custom_call.1} parent=1 // loop_exit
      _
    %201 = vsyncpa [#allocation3], 1
    %s202 = scalar_lea.sflag [#allocation3], 1
    %203 = vsyncpa %s202, 1
    %204 = vsyncpa [#allocation4], 1
    %s205 = scalar_lea.sflag [#allocation4], 1
    %206 = vsyncpa %s205, 1

</llo_original>
